<compile_context>
chip_gen: v7x
topology: tpu7x:2x2x1
jax: 0.10.0
libtpu: 0.0.40
codegen_flags: <defaults>
</compile_context>

<pallas_src>
import jax
import jax.numpy as jnp
from jax.experimental import pallas as pl
from jax.experimental.pallas import tpu as pltpu

# Small, module-consistent shapes (dim_in == dim_out is required by the module:
# LayerNorm(dim_out) is applied to the dim_in-sized channel axis).
B = 2
T = 16
DIM = 32            # dim_in == dim_out
K = 3               # kernel_size
NH = 8              # num_heads
HS = DIM // NH      # head_size
PAD = K // 2
LN_EPS = 1e-5


def dynamic_conv_kernel(x_ref, gamma_ref, beta_ref, wkT_ref, bk_ref,
                        wck_ref, bck_ref, shift_ref, lbias_ref, o_ref):
    # One batch element per grid step: a (C, T) slab, channels on sublanes, time on
    # lanes — PyTorch's NCT layout consumed directly, no transposes anywhere.
    x = x_ref[...].astype(jnp.float32)      # cast after the DMA (input stays native dtype)
    residual = x

    # ----- LayerNorm over channels (sublane-axis reduce) -----
    mean = jnp.mean(x, axis=0, keepdims=True)
    var = jnp.mean((x - mean) ** 2, axis=0, keepdims=True)
    xn = (x - mean) * jax.lax.rsqrt(var + LN_EPS)
    xn = xn * gamma_ref[...] + beta_ref[...]

    # ----- fused GLU linear: one (2C, C) @ (C, T) matmul (bf16 operands, f32 acc) -----
    h = jnp.dot(wkT_ref[...], xn.astype(jnp.bfloat16),
                preferred_element_type=jnp.float32) + bk_ref[...]      # (2C, T)
    k = h[:DIM, :] * jax.nn.sigmoid(h[DIM:, :])                        # (C, T), f32
    k_bf = k.astype(jnp.bfloat16)

    # ----- dynamic conv-kernel logits: all K taps in ONE (K*C, C) @ (C, T) matmul -----
    # head->channel expansion was folded into the weights in the wrapper; per-tap
    # logits are sublane slices at multiples of C (aligned).
    logits = jnp.dot(wck_ref[...], k_bf,
                     preferred_element_type=jnp.float32) + bck_ref[...]  # (K*C, T)
    taps = [logits[kk * DIM:(kk + 1) * DIM, :] for kk in range(K)]
    m = taps[0]
    for lg in taps[1:]:
        m = jnp.maximum(m, lg)
    exps = [jnp.exp(lg - m) for lg in taps]
    denom = exps[0]
    for e in exps[1:]:
        denom = denom + e

    # ----- depthwise light conv over time -----
    # Tap kk needs k[:, t + kk - PAD] with zero padding at the time edges; each shifted
    # copy is one tiny MXU matmul against a shifted identity (padding baked in).  The
    # softmax normalization is deferred: accumulate unnormalized, divide once at the end.
    shifts = shift_ref[...]                                            # (K*T, T), 0/1
    acc = jnp.zeros((DIM, T), jnp.float32)
    for kk in range(K):
        sk = jnp.dot(k_bf, shifts[kk * T:(kk + 1) * T, :],
                     preferred_element_type=jnp.float32)               # (C, T) = k shifted
        acc = acc + exps[kk] * sk

    out = acc / denom + lbias_ref[...] + residual                      # (C, T)
    o_ref[...] = out.astype(o_ref.dtype)


def dynamic_conv(x_bct, params):
    """x_bct: (B, C, T) — PyTorch NCT layout. Returns (B, C, T) in x_bct.dtype."""
    f32, bf16 = jnp.float32, jnp.bfloat16

    gamma = params["gamma"].reshape(DIM, 1).astype(f32)
    beta = params["beta"].reshape(DIM, 1).astype(f32)
    lbias = params["lbias"].reshape(DIM, 1).astype(f32)

    # GLU linear kept whole (one fused matmul); bf16 operands for the MXU.
    wkT = jnp.transpose(params["W_k"], (1, 0)).astype(bf16)            # (2C, C)
    bk = params["b_k"].reshape(2 * DIM, 1).astype(f32)

    # conv_kernel_layer columns are j = h*K + kk (torch .view(B, T, NH, K)).  Fold the
    # head->channel expansion and stack the K taps along the output-row axis so the
    # kernel does ONE (K*C, C) @ (C, T) matmul:
    #   wck[kk*C + c_out, c_in] = W_ck[c_in, head(c_out)*K + kk]
    # (At production DIM with HS >= ~16 prefer the unfolded (K*NH, C) form + per-tap
    #  head->channel broadcast — see perf review; at HS=4 folding is cheaper/simpler.)
    head_of_c = jnp.arange(DIM) // HS                                  # (C,)
    col_idx = head_of_c[None, :] * K + jnp.arange(K)[:, None]          # (K, C)
    wck = jnp.transpose(params["W_ck"][:, col_idx], (1, 2, 0)) \
             .reshape(K * DIM, DIM).astype(bf16)                       # (K*C, C)
    bck = params["b_ck"][col_idx].reshape(K * DIM, 1).astype(f32)      # (K*C, 1)

    # Shifted identities: for tap kk (time offset d = kk - PAD),
    #   (k @ shifts[kk*T:(kk+1)*T, :])[c, t] = k[c, t + d]   (0 outside [0, T)).
    shifts = jnp.concatenate(
        [jnp.eye(T, k=-(kk - PAD), dtype=f32) for kk in range(K)], axis=0
    ).astype(bf16)                                                     # (K*T, T)

    return pl.pallas_call(
        dynamic_conv_kernel,
        out_shape=jax.ShapeDtypeStruct((B, DIM, T), x_bct.dtype),
        grid=(B,),
        in_specs=[
            pl.BlockSpec((None, DIM, T), lambda b: (b, 0, 0)),   # x[b]: (C, T), native dtype
            pl.BlockSpec((DIM, 1), lambda b: (0, 0)),            # LN gamma
            pl.BlockSpec((DIM, 1), lambda b: (0, 0)),            # LN beta
            pl.BlockSpec((2 * DIM, DIM), lambda b: (0, 0)),      # W_k^T (bf16, fused GLU)
            pl.BlockSpec((2 * DIM, 1), lambda b: (0, 0)),        # b_k
            pl.BlockSpec((K * DIM, DIM), lambda b: (0, 0)),      # folded+stacked conv-kernel W (bf16)
            pl.BlockSpec((K * DIM, 1), lambda b: (0, 0)),        # folded+stacked conv-kernel b
            pl.BlockSpec((K * T, T), lambda b: (0, 0)),          # shifted identities (bf16)
            pl.BlockSpec((DIM, 1), lambda b: (0, 0)),            # lconv bias
        ],
        out_specs=pl.BlockSpec((None, DIM, T), lambda b: (b, 0, 0)),
        # Batch axis is independent -> "parallel" (shards across the 2 TCs on v7x;
        # no-op on v5e/v6e).  At production sizes also tile T (>=128 lanes per block)
        # and keep the per-step VMEM footprint within v7x's 64 MiB.
        compiler_params=pltpu.CompilerParams(dimension_semantics=("parallel",)),
    )(x_bct, gamma, beta, wkT, bk, wck, bck, shifts, lbias)


def reference(x_bct, params):
    """Pure-JAX (f32) replica of the PyTorch forward, used for validation."""
    x = jnp.transpose(x_bct, (0, 2, 1)).astype(jnp.float32)            # (B, T, C)
    residual = x
    mean = x.mean(-1, keepdims=True)
    var = ((x - mean) ** 2).mean(-1, keepdims=True)
    xn = (x - mean) / jnp.sqrt(var + LN_EPS) * params["gamma"] + params["beta"]
    h = xn @ params["W_k"] + params["b_k"]
    k = h[..., :DIM] * jax.nn.sigmoid(h[..., DIM:])                    # GLU
    w = (k @ params["W_ck"] + params["b_ck"]).reshape(B, T, NH, K)
    w = jax.nn.softmax(w, axis=-1)
    kpad = jnp.pad(k, ((0, 0), (PAD, PAD), (0, 0)))
    out = jnp.zeros_like(k)
    for kk in range(K):
        wkk = jnp.repeat(w[..., kk], HS, axis=-1)                      # (B, T, C)
        out = out + wkk * kpad[:, kk:kk + T, :]
    out = out + params["lbias"] + residual
    return jnp.transpose(out, (0, 2, 1))


if __name__ == "__main__":
    key = jax.random.PRNGKey(0)
    k_x, k_wk, k_bk, k_wck, k_bck, k_g, k_b, k_lb = jax.random.split(key, 8)

    x = jax.random.normal(k_x, (B, DIM, T), dtype=jnp.float32)         # PyTorch NCT input

    params = {
        # LayerNorm / LightConv-bias params (mildly randomized so their paths are tested)
        "gamma": 1.0 + 0.1 * jax.random.normal(k_g, (1, DIM), dtype=jnp.float32),
        "beta": 0.1 * jax.random.normal(k_b, (1, DIM), dtype=jnp.float32),
        "lbias": 0.1 * jax.random.normal(k_lb, (1, DIM), dtype=jnp.float32),
        # Linear(dim_in, 2*dim_out)
        "W_k": 0.1 * jax.random.normal(k_wk, (DIM, 2 * DIM), dtype=jnp.float32),
        "b_k": 0.1 * jax.random.normal(k_bk, (2 * DIM,), dtype=jnp.float32),
        # Linear(dim_out, kernel_size * num_heads), columns indexed h*K + kk
        "W_ck": 0.1 * jax.random.normal(k_wck, (DIM, NH * K), dtype=jnp.float32),
        "b_ck": 0.1 * jax.random.normal(k_bck, (NH * K,), dtype=jnp.float32),
    }

    out = jax.block_until_ready(dynamic_conv(x, params))
    ref = jax.block_until_ready(reference(x, params))
    assert out.shape == (B, DIM, T)

    # 2e-2 tolerance: the GLU / conv-kernel / shift matmuls use bf16 operands (per the
    # perf review) while the reference is pure f32; the resulting discrepancy is <~1e-2
    # worst-case, whereas any real indexing/layout bug would show up at O(1e-1..1).
    if not jnp.allclose(out, ref, rtol=2e-2, atol=2e-2):
        err = float(jnp.max(jnp.abs(out - ref)))
        raise AssertionError(
            f"Pallas kernel output mismatch vs pure-JAX reference (max |err| = {err:.3e})")

    print("KERNEL_OK")
</pallas_src>

<mosaic_0001>
module attributes {stable_mosaic.version = 11 : i64} {
  func.func @dynamic_conv_kernel(%arg0: i32, %arg1: memref<1x32x16xf32, #tpu.memory_space<vmem>>, %arg2: memref<32x1xf32, #tpu.memory_space<vmem>>, %arg3: memref<32x1xf32, #tpu.memory_space<vmem>>, %arg4: memref<64x32xbf16, #tpu.memory_space<vmem>>, %arg5: memref<64x1xf32, #tpu.memory_space<vmem>>, %arg6: memref<96x32xbf16, #tpu.memory_space<vmem>>, %arg7: memref<96x1xf32, #tpu.memory_space<vmem>>, %arg8: memref<48x16xbf16, #tpu.memory_space<vmem>>, %arg9: memref<32x1xf32, #tpu.memory_space<vmem>>, %arg10: memref<1x32x16xf32, #tpu.memory_space<vmem>>) attributes {dimension_semantics = [#tpu.dimension_semantics<parallel>], iteration_bounds = array<i64: 2>, scalar_prefetch = 0 : i64, scratch_operands = 0 : i64, tpu.core_type = #tpu.core_type<tc>, window_params = [{transform_indices = @transform_0, window_bounds = array<i64: 1, 32, 16>}, {pipeline_mode = #tpu.pipeline_mode<synchronous>, transform_indices = @transform_1, window_bounds = array<i64: 32, 1>}, {pipeline_mode = #tpu.pipeline_mode<synchronous>, transform_indices = @transform_2, window_bounds = array<i64: 32, 1>}, {pipeline_mode = #tpu.pipeline_mode<synchronous>, transform_indices = @transform_3, window_bounds = array<i64: 64, 32>}, {pipeline_mode = #tpu.pipeline_mode<synchronous>, transform_indices = @transform_4, window_bounds = array<i64: 64, 1>}, {pipeline_mode = #tpu.pipeline_mode<synchronous>, transform_indices = @transform_5, window_bounds = array<i64: 96, 32>}, {pipeline_mode = #tpu.pipeline_mode<synchronous>, transform_indices = @transform_6, window_bounds = array<i64: 96, 1>}, {pipeline_mode = #tpu.pipeline_mode<synchronous>, transform_indices = @transform_7, window_bounds = array<i64: 48, 16>}, {pipeline_mode = #tpu.pipeline_mode<synchronous>, transform_indices = @transform_8, window_bounds = array<i64: 32, 1>}, {transform_indices = @transform_9, window_bounds = array<i64: 1, 32, 16>}]} {
    %c0 = arith.constant 0 : index
    %c0_0 = arith.constant 0 : index
    %c0_1 = arith.constant 0 : index
    %0 = vector.load %arg1[%c0, %c0_0, %c0_1] : memref<1x32x16xf32, #tpu.memory_space<vmem>>, vector<1x32x16xf32>
    %1 = vector.shape_cast %0 : vector<1x32x16xf32> to vector<32x16xf32>
    %cst = arith.constant dense<0.000000e+00> : vector<16xf32>
    %2 = vector.multi_reduction <add>, %1, %cst [0] : vector<32x16xf32> to vector<16xf32>
    %3 = vector.shape_cast %2 : vector<16xf32> to vector<1x16xf32>
    %cst_2 = arith.constant 3.200000e+01 : f32
    %4 = vector.broadcast %cst_2 : f32 to vector<1x16xf32>
    %5 = arith.divf %3, %4 : vector<1x16xf32>
    %6 = vector.broadcast %5 : vector<1x16xf32> to vector<32x16xf32>
    %7 = arith.subf %1, %6 : vector<32x16xf32>
    %8 = arith.mulf %7, %7 : vector<32x16xf32>
    %cst_3 = arith.constant dense<0.000000e+00> : vector<16xf32>
    %9 = vector.multi_reduction <add>, %8, %cst_3 [0] : vector<32x16xf32> to vector<16xf32>
    %10 = vector.shape_cast %9 : vector<16xf32> to vector<1x16xf32>
    %cst_4 = arith.constant 3.200000e+01 : f32
    %11 = vector.broadcast %cst_4 : f32 to vector<1x16xf32>
    %12 = arith.divf %10, %11 : vector<1x16xf32>
    %13 = vector.broadcast %5 : vector<1x16xf32> to vector<32x16xf32>
    %14 = arith.subf %1, %13 : vector<32x16xf32>
    %cst_5 = arith.constant 9.99999974E-6 : f32
    %15 = vector.broadcast %cst_5 : f32 to vector<1x16xf32>
    %16 = arith.addf %12, %15 : vector<1x16xf32>
    %17 = math.rsqrt %16 : vector<1x16xf32>
    %18 = vector.broadcast %17 : vector<1x16xf32> to vector<32x16xf32>
    %19 = arith.mulf %14, %18 : vector<32x16xf32>
    %c0_6 = arith.constant 0 : index
    %c0_7 = arith.constant 0 : index
    %20 = vector.load %arg2[%c0_6, %c0_7] : memref<32x1xf32, #tpu.memory_space<vmem>>, vector<32x1xf32>
    %21 = vector.broadcast %20 : vector<32x1xf32> to vector<32x16xf32>
    %22 = arith.mulf %19, %21 : vector<32x16xf32>
    %c0_8 = arith.constant 0 : index
    %c0_9 = arith.constant 0 : index
    %23 = vector.load %arg3[%c0_8, %c0_9] : memref<32x1xf32, #tpu.memory_space<vmem>>, vector<32x1xf32>
    %24 = vector.broadcast %23 : vector<32x1xf32> to vector<32x16xf32>
    %25 = arith.addf %22, %24 : vector<32x16xf32>
    %c0_10 = arith.constant 0 : index
    %c0_11 = arith.constant 0 : index
    %26 = vector.load %arg4[%c0_10, %c0_11] : memref<64x32xbf16, #tpu.memory_space<vmem>>, vector<64x32xbf16>
    %27 = arith.truncf %25 : vector<32x16xf32> to vector<32x16xbf16>
    %cst_12 = arith.constant dense<0.000000e+00> : vector<64x16xf32>
    %28 = tpu.matmul %26, %27, %cst_12 {dimension_numbers = #tpu.dot_dimension_numbers<[1], [0], [0], [1], [0, 0, 1, 1], [], []>} : vector<64x32xbf16>, vector<32x16xbf16>, vector<64x16xf32> -> vector<64x16xf32>
    %c0_13 = arith.constant 0 : index
    %c0_14 = arith.constant 0 : index
    %29 = vector.load %arg5[%c0_13, %c0_14] : memref<64x1xf32, #tpu.memory_space<vmem>>, vector<64x1xf32>
    %30 = vector.broadcast %29 : vector<64x1xf32> to vector<64x16xf32>
    %31 = arith.addf %28, %30 : vector<64x16xf32>
    %32 = vector.extract_strided_slice %31 {offsets = [0, 0], sizes = [32, 16], strides = [1, 1]} : vector<64x16xf32> to vector<32x16xf32>
    %33 = vector.extract_strided_slice %31 {offsets = [32, 0], sizes = [32, 16], strides = [1, 1]} : vector<64x16xf32> to vector<32x16xf32>
    %34 = arith.negf %33 : vector<32x16xf32>
    %35 = math.exp %34 : vector<32x16xf32>
    %cst_15 = arith.constant 1.000000e+00 : f32
    %36 = vector.broadcast %cst_15 : f32 to vector<32x16xf32>
    %37 = arith.addf %36, %35 : vector<32x16xf32>
    %38 = arith.divf %36, %37 : vector<32x16xf32>
    %39 = arith.mulf %32, %38 : vector<32x16xf32>
    %40 = arith.truncf %39 : vector<32x16xf32> to vector<32x16xbf16>
    %c0_16 = arith.constant 0 : index
    %c0_17 = arith.constant 0 : index
    %41 = vector.load %arg6[%c0_16, %c0_17] : memref<96x32xbf16, #tpu.memory_space<vmem>>, vector<96x32xbf16>
    %cst_18 = arith.constant dense<0.000000e+00> : vector<96x16xf32>
    %42 = tpu.matmul %41, %40, %cst_18 {dimension_numbers = #tpu.dot_dimension_numbers<[1], [0], [0], [1], [0, 0, 1, 1], [], []>} : vector<96x32xbf16>, vector<32x16xbf16>, vector<96x16xf32> -> vector<96x16xf32>
    %c0_19 = arith.constant 0 : index
    %c0_20 = arith.constant 0 : index
    %43 = vector.load %arg7[%c0_19, %c0_20] : memref<96x1xf32, #tpu.memory_space<vmem>>, vector<96x1xf32>
    %44 = vector.broadcast %43 : vector<96x1xf32> to vector<96x16xf32>
    %45 = arith.addf %42, %44 : vector<96x16xf32>
    %46 = vector.extract_strided_slice %45 {offsets = [0, 0], sizes = [32, 16], strides = [1, 1]} : vector<96x16xf32> to vector<32x16xf32>
    %47 = vector.extract_strided_slice %45 {offsets = [32, 0], sizes = [32, 16], strides = [1, 1]} : vector<96x16xf32> to vector<32x16xf32>
    %48 = vector.extract_strided_slice %45 {offsets = [64, 0], sizes = [32, 16], strides = [1, 1]} : vector<96x16xf32> to vector<32x16xf32>
    %49 = arith.maximumf %46, %47 : vector<32x16xf32>
    %50 = arith.maximumf %49, %48 : vector<32x16xf32>
    %51 = arith.subf %46, %50 : vector<32x16xf32>
    %52 = math.exp %51 : vector<32x16xf32>
    %53 = arith.subf %47, %50 : vector<32x16xf32>
    %54 = math.exp %53 : vector<32x16xf32>
    %55 = arith.subf %48, %50 : vector<32x16xf32>
    %56 = math.exp %55 : vector<32x16xf32>
    %57 = arith.addf %52, %54 : vector<32x16xf32>
    %58 = arith.addf %57, %56 : vector<32x16xf32>
    %c0_21 = arith.constant 0 : index
    %c0_22 = arith.constant 0 : index
    %59 = vector.load %arg8[%c0_21, %c0_22] : memref<48x16xbf16, #tpu.memory_space<vmem>>, vector<48x16xbf16>
    %cst_23 = arith.constant 0.000000e+00 : f32
    %60 = vector.broadcast %cst_23 : f32 to vector<32x16xf32>
    %61 = vector.extract_strided_slice %59 {offsets = [0, 0], sizes = [16, 16], strides = [1, 1]} : vector<48x16xbf16> to vector<16x16xbf16>
    %cst_24 = arith.constant dense<0.000000e+00> : vector<32x16xf32>
    %62 = tpu.matmul %40, %61, %cst_24 {dimension_numbers = #tpu.dot_dimension_numbers<[1], [0], [0], [1], [0, 0, 1, 1], [], []>} : vector<32x16xbf16>, vector<16x16xbf16>, vector<32x16xf32> -> vector<32x16xf32>
    %63 = arith.mulf %52, %62 : vector<32x16xf32>
    %64 = arith.addf %60, %63 : vector<32x16xf32>
    %65 = vector.extract_strided_slice %59 {offsets = [16, 0], sizes = [16, 16], strides = [1, 1]} : vector<48x16xbf16> to vector<16x16xbf16>
    %cst_25 = arith.constant dense<0.000000e+00> : vector<32x16xf32>
    %66 = tpu.matmul %40, %65, %cst_25 {dimension_numbers = #tpu.dot_dimension_numbers<[1], [0], [0], [1], [0, 0, 1, 1], [], []>} : vector<32x16xbf16>, vector<16x16xbf16>, vector<32x16xf32> -> vector<32x16xf32>
    %67 = arith.mulf %54, %66 : vector<32x16xf32>
    %68 = arith.addf %64, %67 : vector<32x16xf32>
    %69 = vector.extract_strided_slice %59 {offsets = [32, 0], sizes = [16, 16], strides = [1, 1]} : vector<48x16xbf16> to vector<16x16xbf16>
    %cst_26 = arith.constant dense<0.000000e+00> : vector<32x16xf32>
    %70 = tpu.matmul %40, %69, %cst_26 {dimension_numbers = #tpu.dot_dimension_numbers<[1], [0], [0], [1], [0, 0, 1, 1], [], []>} : vector<32x16xbf16>, vector<16x16xbf16>, vector<32x16xf32> -> vector<32x16xf32>
    %71 = arith.mulf %56, %70 : vector<32x16xf32>
    %72 = arith.addf %68, %71 : vector<32x16xf32>
    %73 = arith.divf %72, %58 : vector<32x16xf32>
    %c0_27 = arith.constant 0 : index
    %c0_28 = arith.constant 0 : index
    %74 = vector.load %arg9[%c0_27, %c0_28] : memref<32x1xf32, #tpu.memory_space<vmem>>, vector<32x1xf32>
    %75 = vector.broadcast %74 : vector<32x1xf32> to vector<32x16xf32>
    %76 = arith.addf %73, %75 : vector<32x16xf32>
    %77 = arith.addf %76, %1 : vector<32x16xf32>
    %c0_29 = arith.constant 0 : index
    %c0_30 = arith.constant 0 : index
    %c0_31 = arith.constant 0 : index
    %78 = vector.load %arg10[%c0_29, %c0_30, %c0_31] : memref<1x32x16xf32, #tpu.memory_space<vmem>>, vector<1x32x16xf32>
    %79 = vector.shape_cast %78 : vector<1x32x16xf32> to vector<32x16xf32>
    %80 = vector.shape_cast %77 : vector<32x16xf32> to vector<1x32x16xf32>
    tpu.vector_store %arg10[%c0_29, %c0_30, %c0_31], %80 {strides = array<i32>} : memref<1x32x16xf32, #tpu.memory_space<vmem>>, vector<1x32x16xf32>,
    return
  }
  func.func @transform_0(%arg0: i32) -> (i32, i32, i32) {
    %c0_i32 = arith.constant 0 : i32
    %c0_i32_0 = arith.constant 0 : i32
    %c0_i32_1 = arith.constant 0 : i32
    return %arg0, %c0_i32, %c0_i32_0 : i32, i32, i32
  }
  func.func @transform_1(%arg0: i32) -> (i32, i32) {
    %c0_i32 = arith.constant 0 : i32
    %c0_i32_0 = arith.constant 0 : i32
    %c0_i32_1 = arith.constant 0 : i32
    return %c0_i32, %c0_i32_0 : i32, i32
  }
  func.func @transform_2(%arg0: i32) -> (i32, i32) {
    %c0_i32 = arith.constant 0 : i32
    %c0_i32_0 = arith.constant 0 : i32
    %c0_i32_1 = arith.constant 0 : i32
    return %c0_i32, %c0_i32_0 : i32, i32
  }
  func.func @transform_3(%arg0: i32) -> (i32, i32) {
    %c0_i32 = arith.constant 0 : i32
    %c0_i32_0 = arith.constant 0 : i32
    %c0_i32_1 = arith.constant 0 : i32
    return %c0_i32, %c0_i32_0 : i32, i32
  }
  func.func @transform_4(%arg0: i32) -> (i32, i32) {
    %c0_i32 = arith.constant 0 : i32
    %c0_i32_0 = arith.constant 0 : i32
    %c0_i32_1 = arith.constant 0 : i32
    return %c0_i32, %c0_i32_0 : i32, i32
  }
  func.func @transform_5(%arg0: i32) -> (i32, i32) {
    %c0_i32 = arith.constant 0 : i32
    %c0_i32_0 = arith.constant 0 : i32
    %c0_i32_1 = arith.constant 0 : i32
    return %c0_i32, %c0_i32_0 : i32, i32
  }
  func.func @transform_6(%arg0: i32) -> (i32, i32) {
    %c0_i32 = arith.constant 0 : i32
    %c0_i32_0 = arith.constant 0 : i32
    %c0_i32_1 = arith.constant 0 : i32
    return %c0_i32, %c0_i32_0 : i32, i32
  }
  func.func @transform_7(%arg0: i32) -> (i32, i32) {
    %c0_i32 = arith.constant 0 : i32
    %c0_i32_0 = arith.constant 0 : i32
    %c0_i32_1 = arith.constant 0 : i32
    return %c0_i32, %c0_i32_0 : i32, i32
  }
  func.func @transform_8(%arg0: i32) -> (i32, i32) {
    %c0_i32 = arith.constant 0 : i32
    %c0_i32_0 = arith.constant 0 : i32
    %c0_i32_1 = arith.constant 0 : i32
    return %c0_i32, %c0_i32_0 : i32, i32
  }
  func.func @transform_9(%arg0: i32) -> (i32, i32, i32) {
    %c0_i32 = arith.constant 0 : i32
    %c0_i32_0 = arith.constant 0 : i32
    %c0_i32_1 = arith.constant 0 : i32
    return %arg0, %c0_i32, %c0_i32_0 : i32, i32, i32
  }
}

</mosaic_0001>

<llo_original>
// kernel: tpu_custom_call.1
$region0: #{tpu_custom_call.1}
  #allocation0 [shape = 'u32[]', space=smem, size = 0x4, offset = 0x4, fixed_abs, tag = 'smem constant byte address 0x4 - core index']
  #allocation1 [shape = 'u32[144,128]{1,0:T(1,128)}', space=vmem, size = 0x12000, scoped, tag = 'internal scratch']
  %s0 = inlined_call_operand.vmem [shape: f32[2,32,16], index: 0, kind: input, shape index: {}]
  %s1 = inlined_call_operand.vmem [shape: f32[32,1], index: 1, kind: input, shape index: {}]
  %s2 = inlined_call_operand.vmem [shape: f32[32,1], index: 2, kind: input, shape index: {}]
  %s3 = inlined_call_operand.vmem [shape: bf16[64,32], index: 3, kind: input, shape index: {}]
  %s4 = inlined_call_operand.vmem [shape: f32[64,1], index: 4, kind: input, shape index: {}]
  %s5 = inlined_call_operand.vmem [shape: bf16[96,32], index: 5, kind: input, shape index: {}]
  %s6 = inlined_call_operand.vmem [shape: f32[96,1], index: 6, kind: input, shape index: {}]
  %s7 = inlined_call_operand.vmem [shape: bf16[48,16], index: 7, kind: input, shape index: {}]
  %s8 = inlined_call_operand.vmem [shape: f32[32,1], index: 8, kind: input, shape index: {}]
  %s9 = inlined_call_operand.vmem [shape: f32[2,32,16], index: 9, kind: output, shape index: {}]
  %s10 = sld [smem:[#allocation0]]
  $region69: #{tpu_custom_call.1} parent=0
    _
  %s12 = ssub.s32 1, %s10
  %s13 = scalar_select 0, %s12, %s10
  loop: start=0, step=1, limit=4
  $region2: #{tpu_custom_call.1} parent=0 // loop_pre_header
    _
  $region3: #{tpu_custom_call.1} parent=0 // loop_header
    %s15 = sphi 0, %s19
    %p16 = scmp.ge.s32.totalorder %s15, 4
    %s25 = sphi 0, %s27
    %s28 = sphi 0, %s25
    %s29 = sphi 0, %s28
    %s45 = sphi 0, %s29
    %s49 = sphi 0, %s49
    %s51 = sphi 0, %s49
    %s52 = sphi 0, %s51
    %s66 = sphi 0, %s52
    %s70 = sphi 0, %s70
    %s72 = sphi 0, %s70
    %s73 = sphi 0, %s72
    %s87 = sphi 0, %s73
    %s91 = sphi 0, %s91
    %s93 = sphi 0, %s91
    %s94 = sphi 0, %s93
    %s108 = sphi 0, %s94
    %s112 = sphi 0, %s112
    %s114 = sphi 0, %s112
    %s115 = sphi 0, %s114
    %s129 = sphi 0, %s115
    %s133 = sphi 0, %s133
    %s135 = sphi 0, %s133
    %s136 = sphi 0, %s135
    %s150 = sphi 0, %s136
    %s154 = sphi 0, %s154
    %s156 = sphi 0, %s154
    %s157 = sphi 0, %s156
    %s171 = sphi 0, %s157
    %s175 = sphi 0, %s175
    %s177 = sphi 0, %s175
    %s178 = sphi 0, %s177
    %s192 = sphi 0, %s178
    %s196 = sphi 0, %s196
    %s198 = sphi 0, %s196
    %s199 = sphi 0, %s198
    %s213 = sphi 0, %s199
    %s219 = sphi 0, %s221
    %s222 = sphi 0, %s219
    %s223 = sphi 0, %s222
    %s239 = sphi 0, %s223
  $region4: #{tpu_custom_call.1} parent=0 // loop_header_branch
    %18 = sbr.rel (%p16) target = $region8
  $region5: #{tpu_custom_call.1} parent=0 // loop_body
    %s20 = ssub.s32 %s15, 1
    %s21 = ssub.s32 %s15, 2
    %s22 = sadd.s32 %s15, 1
    %s23 = ssub.s32 %s15, %s22
    %p24 = scmp.eq.s32.totalorder %s23, 0
    %s26 = sadd.s32 %s25, 1
    %s27 = scalar_select %p24, %s25, %s26
    %p30 = pneg %p24
    %p31 = scmp.eq.s32.totalorder %s15, 1
    %p32 = por %p30, %p31
    %p33 = scmp.ne.s32.totalorder %s25, %s28
    %p34 = scmp.eq.s32.totalorder %s15, 0
    %p35 = por %p33, %p34
    %p36 = scmp.ne.s32.totalorder %s25, %s28
    %p37 = scmp.eq.s32.totalorder %s20, 1
    %p38 = por %p36, %p37
    %p39 = scmp.ne.s32.totalorder %s28, %s29
    %p40 = scmp.eq.s32.totalorder %s20, 0
    %p41 = por %p39, %p40
    %p42 = scmp.ne.s32.totalorder %s28, %s29
    %p43 = scmp.eq.s32.totalorder %s21, 1
    %p44 = por %p42, %p43
    %p46 = scmp.ne.s32.totalorder %s29, %s45
    %p47 = scmp.eq.s32.totalorder %s21, 0
    %p48 = por %p46, %p47
    %s50 = sadd.s32 %s49, 1
    %p53 = scmp.eq.s32.totalorder %s15, 1
    %p54 = scmp.ne.s32.totalorder %s49, %s51
    %p55 = scmp.eq.s32.totalorder %s15, 0
    %p56 = por %p54, %p55
    %p57 = scmp.ne.s32.totalorder %s49, %s51
    %p58 = scmp.eq.s32.totalorder %s20, 1
    %p59 = por %p57, %p58
    %p60 = scmp.ne.s32.totalorder %s51, %s52
    %p61 = scmp.eq.s32.totalorder %s20, 0
    %p62 = por %p60, %p61
    %p63 = scmp.ne.s32.totalorder %s51, %s52
    %p64 = scmp.eq.s32.totalorder %s21, 1
    %p65 = por %p63, %p64
    %p67 = scmp.ne.s32.totalorder %s52, %s66
    %p68 = scmp.eq.s32.totalorder %s21, 0
    %p69 = por %p67, %p68
    %s71 = sadd.s32 %s70, 1
    %p74 = scmp.eq.s32.totalorder %s15, 1
    %p75 = scmp.ne.s32.totalorder %s70, %s72
    %p76 = scmp.eq.s32.totalorder %s15, 0
    %p77 = por %p75, %p76
    %p78 = scmp.ne.s32.totalorder %s70, %s72
    %p79 = scmp.eq.s32.totalorder %s20, 1
    %p80 = por %p78, %p79
    %p81 = scmp.ne.s32.totalorder %s72, %s73
    %p82 = scmp.eq.s32.totalorder %s20, 0
    %p83 = por %p81, %p82
    %p84 = scmp.ne.s32.totalorder %s72, %s73
    %p85 = scmp.eq.s32.totalorder %s21, 1
    %p86 = por %p84, %p85
    %p88 = scmp.ne.s32.totalorder %s73, %s87
    %p89 = scmp.eq.s32.totalorder %s21, 0
    %p90 = por %p88, %p89
    %s92 = sadd.s32 %s91, 1
    %p95 = scmp.eq.s32.totalorder %s15, 1
    %p96 = scmp.ne.s32.totalorder %s91, %s93
    %p97 = scmp.eq.s32.totalorder %s15, 0
    %p98 = por %p96, %p97
    %p99 = scmp.ne.s32.totalorder %s91, %s93
    %p100 = scmp.eq.s32.totalorder %s20, 1
    %p101 = por %p99, %p100
    %p102 = scmp.ne.s32.totalorder %s93, %s94
    %p103 = scmp.eq.s32.totalorder %s20, 0
    %p104 = por %p102, %p103
    %p105 = scmp.ne.s32.totalorder %s93, %s94
    %p106 = scmp.eq.s32.totalorder %s21, 1
    %p107 = por %p105, %p106
    %p109 = scmp.ne.s32.totalorder %s94, %s108
    %p110 = scmp.eq.s32.totalorder %s21, 0
    %p111 = por %p109, %p110
    %s113 = sadd.s32 %s112, 1
    %p116 = scmp.eq.s32.totalorder %s15, 1
    %p117 = scmp.ne.s32.totalorder %s112, %s114
    %p118 = scmp.eq.s32.totalorder %s15, 0
    %p119 = por %p117, %p118
    %p120 = scmp.ne.s32.totalorder %s112, %s114
    %p121 = scmp.eq.s32.totalorder %s20, 1
    %p122 = por %p120, %p121
    %p123 = scmp.ne.s32.totalorder %s114, %s115
    %p124 = scmp.eq.s32.totalorder %s20, 0
    %p125 = por %p123, %p124
    %p126 = scmp.ne.s32.totalorder %s114, %s115
    %p127 = scmp.eq.s32.totalorder %s21, 1
    %p128 = por %p126, %p127
    %p130 = scmp.ne.s32.totalorder %s115, %s129
    %p131 = scmp.eq.s32.totalorder %s21, 0
    %p132 = por %p130, %p131
    %s134 = sadd.s32 %s133, 1
    %p137 = scmp.eq.s32.totalorder %s15, 1
    %p138 = scmp.ne.s32.totalorder %s133, %s135
    %p139 = scmp.eq.s32.totalorder %s15, 0
    %p140 = por %p138, %p139
    %p141 = scmp.ne.s32.totalorder %s133, %s135
    %p142 = scmp.eq.s32.totalorder %s20, 1
    %p143 = por %p141, %p142
    %p144 = scmp.ne.s32.totalorder %s135, %s136
    %p145 = scmp.eq.s32.totalorder %s20, 0
    %p146 = por %p144, %p145
    %p147 = scmp.ne.s32.totalorder %s135, %s136
    %p148 = scmp.eq.s32.totalorder %s21, 1
    %p149 = por %p147, %p148
    %p151 = scmp.ne.s32.totalorder %s136, %s150
    %p152 = scmp.eq.s32.totalorder %s21, 0
    %p153 = por %p151, %p152
    %s155 = sadd.s32 %s154, 1
    %p158 = scmp.eq.s32.totalorder %s15, 1
    %p159 = scmp.ne.s32.totalorder %s154, %s156
    %p160 = scmp.eq.s32.totalorder %s15, 0
    %p161 = por %p159, %p160
    %p162 = scmp.ne.s32.totalorder %s154, %s156
    %p163 = scmp.eq.s32.totalorder %s20, 1
    %p164 = por %p162, %p163
    %p165 = scmp.ne.s32.totalorder %s156, %s157
    %p166 = scmp.eq.s32.totalorder %s20, 0
    %p167 = por %p165, %p166
    %p168 = scmp.ne.s32.totalorder %s156, %s157
    %p169 = scmp.eq.s32.totalorder %s21, 1
    %p170 = por %p168, %p169
    %p172 = scmp.ne.s32.totalorder %s157, %s171
    %p173 = scmp.eq.s32.totalorder %s21, 0
    %p174 = por %p172, %p173
    %s176 = sadd.s32 %s175, 1
    %p179 = scmp.eq.s32.totalorder %s15, 1
    %p180 = scmp.ne.s32.totalorder %s175, %s177
    %p181 = scmp.eq.s32.totalorder %s15, 0
    %p182 = por %p180, %p181
    %p183 = scmp.ne.s32.totalorder %s175, %s177
    %p184 = scmp.eq.s32.totalorder %s20, 1
    %p185 = por %p183, %p184
    %p186 = scmp.ne.s32.totalorder %s177, %s178
    %p187 = scmp.eq.s32.totalorder %s20, 0
    %p188 = por %p186, %p187
    %p189 = scmp.ne.s32.totalorder %s177, %s178
    %p190 = scmp.eq.s32.totalorder %s21, 1
    %p191 = por %p189, %p190
    %p193 = scmp.ne.s32.totalorder %s178, %s192
    %p194 = scmp.eq.s32.totalorder %s21, 0
    %p195 = por %p193, %p194
    %s197 = sadd.s32 %s196, 1
    %p200 = scmp.eq.s32.totalorder %s15, 1
    %p201 = scmp.ne.s32.totalorder %s196, %s198
    %p202 = scmp.eq.s32.totalorder %s15, 0
    %p203 = por %p201, %p202
    %p204 = scmp.ne.s32.totalorder %s196, %s198
    %p205 = scmp.eq.s32.totalorder %s20, 1
    %p206 = por %p204, %p205
    %p207 = scmp.ne.s32.totalorder %s198, %s199
    %p208 = scmp.eq.s32.totalorder %s20, 0
    %p209 = por %p207, %p208
    %p210 = scmp.ne.s32.totalorder %s198, %s199
    %p211 = scmp.eq.s32.totalorder %s21, 1
    %p212 = por %p210, %p211
    %p214 = scmp.ne.s32.totalorder %s199, %s213
    %p215 = scmp.eq.s32.totalorder %s21, 0
    %p216 = por %p214, %p215
    %s217 = ssub.s32 %s15, %s22
    %p218 = scmp.eq.s32.totalorder %s217, 0
    %s220 = sadd.s32 %s219, 1
    %s221 = scalar_select %p218, %s219, %s220
    %p224 = pneg %p218
    %p225 = scmp.eq.s32.totalorder %s15, 1
    %p226 = por %p224, %p225
    %p227 = scmp.ne.s32.totalorder %s219, %s222
    %p228 = scmp.eq.s32.totalorder %s15, 0
    %p229 = por %p227, %p228
    %p230 = scmp.ne.s32.totalorder %s219, %s222
    %p231 = scmp.eq.s32.totalorder %s20, 1
    %p232 = por %p230, %p231
    %p233 = scmp.ne.s32.totalorder %s222, %s223
    %p234 = scmp.eq.s32.totalorder %s20, 0
    %p235 = por %p233, %p234
    %p236 = scmp.ne.s32.totalorder %s222, %s223
    %p237 = scmp.eq.s32.totalorder %s21, 1
    %p238 = por %p236, %p237
    %p240 = scmp.ne.s32.totalorder %s223, %s239
    %p241 = scmp.eq.s32.totalorder %s21, 0
    %p242 = por %p240, %p241
    %p243 = scmp.le.s32.totalorder 1, %s15
    %p244 = scmp.lt.s32.totalorder %s15, 3
    %p245 = pnand %p243, %p244
    %p246 = pneg %p245
    // Predicated region
    $region9: #{tpu_custom_call.1} parent=5 // pred_check
      _
    $region10: #{tpu_custom_call.1} parent=5 // pred_check_branch
      %248 = sbr.rel (%p245) target = $region12
    $region11: #{tpu_custom_call.1} parent=5 // pred_region
      %s249 = ssub.s32 %s15, 1
      // Predicated region
      $region13: #{tpu_custom_call.1} parent=11 // pred_check
        %p250 = pneg %p62
      $region14: #{tpu_custom_call.1} parent=11 // pred_check_branch
        %252 = sbr.rel (%p250) target = $region16
      $region15: #{tpu_custom_call.1} parent=11 // pred_region
        _
      $region16: #{tpu_custom_call.1} parent=11 // pred_fallthru
        _
      // Predicated region
      $region17: #{tpu_custom_call.1} parent=11 // pred_check
        %p253 = pneg %p83
      $region18: #{tpu_custom_call.1} parent=11 // pred_check_branch
        %255 = sbr.rel (%p253) target = $region20
      $region19: #{tpu_custom_call.1} parent=11 // pred_region
        _
      $region20: #{tpu_custom_call.1} parent=11 // pred_fallthru
        _
      // Predicated region
      $region21: #{tpu_custom_call.1} parent=11 // pred_check
        %p256 = pneg %p104
      $region22: #{tpu_custom_call.1} parent=11 // pred_check_branch
        %258 = sbr.rel (%p256) target = $region24
      $region23: #{tpu_custom_call.1} parent=11 // pred_region
        _
      $region24: #{tpu_custom_call.1} parent=11 // pred_fallthru
        _
      // Predicated region
      $region25: #{tpu_custom_call.1} parent=11 // pred_check
        %p259 = pneg %p125
      $region26: #{tpu_custom_call.1} parent=11 // pred_check_branch
        %261 = sbr.rel (%p259) target = $region28
      $region27: #{tpu_custom_call.1} parent=11 // pred_region
        _
      $region28: #{tpu_custom_call.1} parent=11 // pred_fallthru
        _
      // Predicated region
      $region29: #{tpu_custom_call.1} parent=11 // pred_check
        %p262 = pneg %p146
      $region30: #{tpu_custom_call.1} parent=11 // pred_check_branch
        %264 = sbr.rel (%p262) target = $region32
      $region31: #{tpu_custom_call.1} parent=11 // pred_region
        _
      $region32: #{tpu_custom_call.1} parent=11 // pred_fallthru
        _
      // Predicated region
      $region33: #{tpu_custom_call.1} parent=11 // pred_check
        %p265 = pneg %p167
      $region34: #{tpu_custom_call.1} parent=11 // pred_check_branch
        %267 = sbr.rel (%p265) target = $region36
      $region35: #{tpu_custom_call.1} parent=11 // pred_region
        _
      $region36: #{tpu_custom_call.1} parent=11 // pred_fallthru
        _
      // Predicated region
      $region37: #{tpu_custom_call.1} parent=11 // pred_check
        %p268 = pneg %p188
      $region38: #{tpu_custom_call.1} parent=11 // pred_check_branch
        %270 = sbr.rel (%p268) target = $region40
      $region39: #{tpu_custom_call.1} parent=11 // pred_region
        _
      $region40: #{tpu_custom_call.1} parent=11 // pred_fallthru
        _
      // Predicated region
      $region41: #{tpu_custom_call.1} parent=11 // pred_check
        %p271 = pneg %p209
      $region42: #{tpu_custom_call.1} parent=11 // pred_check_branch
        %273 = sbr.rel (%p271) target = $region44
      $region43: #{tpu_custom_call.1} parent=11 // pred_region
        _
      $region44: #{tpu_custom_call.1} parent=11 // pred_fallthru
        _
    $region12: #{tpu_custom_call.1} parent=5 // pred_fallthru
      _
    %p274 = scmp.lt.s32.totalorder %s15, 2
    // Predicated region
    $region45: #{tpu_custom_call.1} parent=5 // pred_check
      %p275 = pneg %p274
    $region46: #{tpu_custom_call.1} parent=5 // pred_check_branch
      %277 = sbr.rel (%p275) target = $region48
    $region47: #{tpu_custom_call.1} parent=5 // pred_region
      // Predicated region
      $region49: #{tpu_custom_call.1} parent=47 // pred_check
        %p278 = pneg %p35
      $region50: #{tpu_custom_call.1} parent=47 // pred_check_branch
        %280 = sbr.rel (%p278) target = $region52
      $region51: #{tpu_custom_call.1} parent=47 // pred_region
        %p281 = scmp.lt.s32.totalorder %s15, 1
        %s282 = scalar_select %p281, %s15, 1
        %s283 = smul.addr %s282, 4
        %s284 = smul.addr %s283, 8
        %s285 = scalar_lea.vmem %s0, %s284
      $region52: #{tpu_custom_call.1} parent=47 // pred_fallthru
        _
    $region48: #{tpu_custom_call.1} parent=5 // pred_fallthru
      _
    %p286 = scmp.le.s32.totalorder 1, %s15
    %p287 = scmp.lt.s32.totalorder %s15, 3
    %p288 = pnand %p286, %p287
    %p289 = pneg %p288
    // Predicated region
    $region53: #{tpu_custom_call.1} parent=5 // pred_check
      _
    $region54: #{tpu_custom_call.1} parent=5 // pred_check_branch
      %291 = sbr.rel (%p288) target = $region56
    $region55: #{tpu_custom_call.1} parent=5 // pred_region
      %s292 = ssub.s32 %s15, 1
      %p293 = scmp.lt.s32.totalorder %s20, 1
      %s294 = scalar_select %p293, %s20, 1
      %s295 = smul.addr %s294, 4
      %s296 = smul.addr %s295, 8
      %s297 = scalar_lea.vmem %s0, %s296
      %p298 = pneg %p41
      %p299 = pneg %p38
      %p300 = pneg %p62
      %p301 = pneg %p59
      %p302 = pneg %p83
      %p303 = pneg %p80
      %p304 = pneg %p104
      %p305 = pneg %p101
      %p306 = pneg %p125
      %p307 = pneg %p122
      %p308 = pneg %p146
      %p309 = pneg %p143
      %p310 = pneg %p167
      %p311 = pneg %p164
      %p312 = pneg %p188
      %p313 = pneg %p185
      %p314 = pneg %p209
      %p315 = pneg %p206
      %p316 = pneg %p235
      %p317 = pneg %p232
      %p318 = scmp.lt.s32.totalorder %s20, 1
      %s319 = scalar_select %p318, %s20, 1
      %s320 = smul.addr %s319, 4
      %s321 = smul.addr %s320, 8
      %s322 = scalar_lea.vmem %s9, %s321
      %p323 = scmp.lt.s32.totalorder %s20, 1
      %s324 = scalar_select %p323, %s20, 1
      %s325 = smul.addr %s324, 4
      %s326 = smul.addr %s325, 8
      %s327 = scalar_lea.vmem %s0, %s326
      %p328 = scmp.lt.s32.totalorder %s20, 1
      %s329 = scalar_select %p328, %s20, 1
      %s330 = smul.addr %s329, 4
      %s331 = smul.addr %s330, 8
      %s332 = scalar_lea.vmem %s9, %s331
      %v334 = vld [vmem:[%s327] sm:$0xff]
      %v335 = vld [vmem:[%s327 + $0x8] sm:$0xff]
      %v336 = vld [vmem:[%s327 + $0x10] sm:$0xff]
      %v337 = vld [vmem:[%s327 + $0x18] sm:$0xff]
      %vm338 = vcmask 130048
      %v339 = vsel %vm338, %v334, 0.0
      %v340 = vsel %vm338, %v335, 0.0
      %v341 = vadd.f32 %v339, %v340
      %v342 = vsel %vm338, %v336, 0.0
      %v343 = vadd.f32 %v341, %v342
      %v344 = vsel %vm338, %v337, 0.0
      %v345 = vadd.f32 %v343, %v344
      %v346 = vrot.slane %v345, 4
      %v347 = vadd.f32 %v345, %v346
      %v348 = vrot.slane %v347, 2
      %v349 = vadd.f32 %v347, %v348
      %v350 = vrot.slane %v349, 1
      %v351 = vadd.f32 %v349, %v350
      %v352 = vrcp.pop 32.0
      %v353 = vmul.f32 %v351, %v352
      %v354 = vsub.f32 %v334, %v353
      %v355 = vsub.f32 %v335, %v353
      %v356 = vsub.f32 %v336, %v353
      %v357 = vsub.f32 %v337, %v353
      %v358 = vmul.f32 %v354, %v354
      %v359 = vmul.f32 %v355, %v355
      %v360 = vmul.f32 %v356, %v356
      %v361 = vmul.f32 %v357, %v357
      %v362 = vsel %vm338, %v358, 0.0
      %v363 = vsel %vm338, %v359, 0.0
      %v364 = vadd.f32 %v362, %v363
      %v365 = vsel %vm338, %v360, 0.0
      %v366 = vadd.f32 %v364, %v365
      %v367 = vsel %vm338, %v361, 0.0
      %v368 = vadd.f32 %v366, %v367
      %v369 = vrot.slane %v368, 4
      %v370 = vadd.f32 %v368, %v369
      %v371 = vrot.slane %v370, 2
      %v372 = vadd.f32 %v370, %v371
      %v373 = vrot.slane %v372, 1
      %v374 = vadd.f32 %v372, %v373
      %v375 = vmul.f32 %v374, %v352
      %v376 = vadd.f32 %v375, 1e-05
      %v377 = vrsqrt.pop %v376
      %v378 = vmul.f32 %v354, %v377
      %v379 = vmul.f32 %v355, %v377
      %v380 = vmul.f32 %v356, %v377
      %v381 = vmul.f32 %v357, %v377
      %v382 = vld [vmem:[%s1] sm:$0xff]
      %v383 = vld [vmem:[%s1 + $0x8] sm:$0xff]
      %v384 = vld [vmem:[%s1 + $0x10] sm:$0xff]
      %v385 = vld [vmem:[%s1 + $0x18] sm:$0xff]
      %387 = vset.pattern.permute.xlu0 0
      %388 = vperm.xlu0 %387, %v382
      %v389 = vpop.permute.xlu0 %388
      %392 = vset.pattern.permute.xlu0 0
      %393 = vperm.xlu0 %392, %v383
      %v394 = vpop.permute.xlu0 %393
      %397 = vset.pattern.permute.xlu0 0
      %398 = vperm.xlu0 %397, %v384
      %v399 = vpop.permute.xlu0 %398
      %402 = vset.pattern.permute.xlu0 0
      %403 = vperm.xlu0 %402, %v385
      %v404 = vpop.permute.xlu0 %403
      %v406 = vmul.f32 %v378, %v389
      %v407 = vmul.f32 %v379, %v394
      %v408 = vmul.f32 %v380, %v399
      %v409 = vmul.f32 %v381, %v404
      %v410 = vld [vmem:[%s2] sm:$0xff]
      %v411 = vld [vmem:[%s2 + $0x8] sm:$0xff]
      %v412 = vld [vmem:[%s2 + $0x10] sm:$0xff]
      %v413 = vld [vmem:[%s2 + $0x18] sm:$0xff]
      %415 = vset.pattern.permute.xlu0 0
      %416 = vperm.xlu0 %415, %v410
      %v417 = vpop.permute.xlu0 %416
      %420 = vset.pattern.permute.xlu0 0
      %421 = vperm.xlu0 %420, %v411
      %v422 = vpop.permute.xlu0 %421
      %425 = vset.pattern.permute.xlu0 0
      %426 = vperm.xlu0 %425, %v412
      %v427 = vpop.permute.xlu0 %426
      %430 = vset.pattern.permute.xlu0 0
      %431 = vperm.xlu0 %430, %v413
      %v432 = vpop.permute.xlu0 %431
      %v434 = vadd.f32 %v406, %v417
      %v435 = vadd.f32 %v407, %v422
      %v436 = vadd.f32 %v408, %v427
      %v437 = vadd.f32 %v409, %v432
      %v438 = vld [vmem:[%s3] sm:$0xf]
      %v439 = vld [vmem:[%s3 + $0x4] sm:$0xf]
      %v440 = vld [vmem:[%s3 + $0x8] sm:$0xf]
      %v441 = vld [vmem:[%s3 + $0xc] sm:$0xf]
      %v442 = vld [vmem:[%s3 + $0x10] sm:$0xf]
      %v443 = vld [vmem:[%s3 + $0x14] sm:$0xf]
      %v444 = vld [vmem:[%s3 + $0x18] sm:$0xf]
      %v445 = vld [vmem:[%s3 + $0x1c] sm:$0xf]
      %v446 = vpack.c.bf16 %v435, %v434
      %v447 = vpack.c.bf16 %v437, %v436
      %v448 = vld [vmem:[%s4] sm:$0xff]
      %v449 = vld [vmem:[%s4 + $0x8] sm:$0xff]
      %v450 = vld [vmem:[%s4 + $0x10] sm:$0xff]
      %v451 = vld [vmem:[%s4 + $0x18] sm:$0xff]
      %v452 = vld [vmem:[%s4 + $0x20] sm:$0xff]
      %v453 = vld [vmem:[%s4 + $0x28] sm:$0xff]
      %v454 = vld [vmem:[%s4 + $0x30] sm:$0xff]
      %v455 = vld [vmem:[%s4 + $0x38] sm:$0xff]
      %457 = vset.pattern.permute.xlu0 0
      %458 = vperm.xlu0 %457, %v448
      %v459 = vpop.permute.xlu0 %458
      %462 = vset.pattern.permute.xlu0 0
      %463 = vperm.xlu0 %462, %v449
      %v464 = vpop.permute.xlu0 %463
      %467 = vset.pattern.permute.xlu0 0
      %468 = vperm.xlu0 %467, %v450
      %v469 = vpop.permute.xlu0 %468
      %472 = vset.pattern.permute.xlu0 0
      %473 = vperm.xlu0 %472, %v451
      %v474 = vpop.permute.xlu0 %473
      %477 = vset.pattern.permute.xlu0 0
      %478 = vperm.xlu0 %477, %v452
      %v479 = vpop.permute.xlu0 %478
      %482 = vset.pattern.permute.xlu0 0
      %483 = vperm.xlu0 %482, %v453
      %v484 = vpop.permute.xlu0 %483
      %487 = vset.pattern.permute.xlu0 0
      %488 = vperm.xlu0 %487, %v454
      %v489 = vpop.permute.xlu0 %488
      %492 = vset.pattern.permute.xlu0 0
      %493 = vperm.xlu0 %492, %v455
      %v494 = vpop.permute.xlu0 %493
      %v504 = vunpack.c.l.b16 %v438
      %v505 = vunpack.c.l.b16 %v439
      %v506 = vunpack.c.l.b16 %v440
      %v507 = vunpack.c.l.b16 %v441
      %v508 = vunpack.c.l.b16 %v442
      %v509 = vunpack.c.l.b16 %v443
      %v510 = vunpack.c.l.b16 %v444
      %v511 = vunpack.c.l.b16 %v445
      %v512 = vpack.c.b16 %v505, %v504
      %v513 = vpack.c.b16 %v507, %v506
      %v514 = vpack.c.b16 %v509, %v508
      %v515 = vpack.c.b16 %v511, %v510
      %vm516 = vcmask 261120
      %v518 = vsel %vm516, %v512, 0
      %v521 = vsel %vm516, %v513, 0
      %v524 = vsel %vm516, %v514, 0
      %v527 = vsel %vm516, %v515, 0
      %529 = vmatprep.subr.bf16.mxu0 0
      %530 = vmatpush1.bf16.msra.mxu0 %v446
      %531 = vmatprep.subr.bf16.mxu0 0
      %532 = vmatpush1.bf16.msra.mxu0 %v447
      %533 = vmatprep.subr.bf16.mxu0 0
      %534 = vmatpush1.bf16.msra.mxu0 0
      %535 = vmatprep.subr.bf16.mxu0 0
      %536 = vmatpush1.bf16.msra.mxu0 0
      %537 = vmatprep.subr.bf16.mxu0 0
      %538 = vmatpush1.bf16.msra.mxu0 0
      %539 = vmatprep.subr.bf16.mxu0 0
      %540 = vmatpush1.bf16.msra.mxu0 0
      %541 = vmatprep.subr.bf16.mxu0 0
      %542 = vmatpush1.bf16.msra.mxu0 0
      %543 = vmatprep.subr.bf16.mxu0 0
      %544 = vmatpush1.bf16.msra.mxu0 0
      %545 = vmatprep.subr.bf16.mxu0 0
      %546 = vmatpush1.bf16.msra.mxu0 0
      %547 = vmatprep.subr.bf16.mxu0 0
      %548 = vmatpush1.bf16.msra.mxu0 0
      %549 = vmatprep.subr.bf16.mxu0 0
      %550 = vmatpush1.bf16.msra.mxu0 0
      %551 = vmatprep.subr.bf16.mxu0 0
      %552 = vmatpush1.bf16.msra.mxu0 0
      %553 = vmatprep.subr.bf16.mxu0 0
      %554 = vmatpush1.bf16.msra.mxu0 0
      %555 = vmatprep.subr.bf16.mxu0 0
      %556 = vmatpush1.bf16.msra.mxu0 0
      %557 = vmatprep.subr.bf16.mxu0 0
      %558 = vmatpush1.bf16.msra.mxu0 0
      %559 = vmatprep.subr.bf16.mxu0 0
      %560 = vmatpush1.bf16.msra.mxu0 0
      %561 = vmatprep.mubr.bf16.mxu0 0
      %562 = vmatmul.mubr.bf16.gmra.mrb[0].mxu0 %v518
      %v563 = vpop.f32.mrb[0].mxu0
      %v564 = vadd.f32 %v459, %v563
      %v565 = vpop.f32.mrb[0].mxu0
      %v566 = vpop.f32.mrb[0].mxu0
      %v567 = vadd.f32 %v464, %v566
      %v568 = vpop.f32.mrb[0].mxu0
      %569 = vmatprep.mubr.bf16.mxu0 0
      %570 = vmatmul.mubr.bf16.gmra.mrb[0].mxu0 %v521
      %v571 = vpop.f32.mrb[0].mxu0
      %v572 = vadd.f32 %v469, %v571
      %v573 = vpop.f32.mrb[0].mxu0
      %v574 = vpop.f32.mrb[0].mxu0
      %v575 = vadd.f32 %v474, %v574
      %v576 = vpop.f32.mrb[0].mxu0
      %577 = vmatprep.mubr.bf16.mxu0 0
      %578 = vmatmul.mubr.bf16.gmra.mrb[0].mxu0 %v524
      %v579 = vpop.f32.mrb[0].mxu0
      %v580 = vadd.f32 %v479, %v579
      %v581 = vpop.f32.mrb[0].mxu0
      %v582 = vpop.f32.mrb[0].mxu0
      %v583 = vadd.f32 %v484, %v582
      %v584 = vpop.f32.mrb[0].mxu0
      %585 = vmatprep.mubr.bf16.mxu0 0
      %586 = vmatmul.mubr.bf16.gmra.mrb[0].mxu0 %v527
      %v587 = vpop.f32.mrb[0].mxu0
      %v588 = vadd.f32 %v489, %v587
      %v589 = vpop.f32.mrb[0].mxu0
      %v590 = vpop.f32.mrb[0].mxu0
      %v591 = vadd.f32 %v494, %v590
      %v592 = vpop.f32.mrb[0].mxu0
      %593 = vdwg.mxu0
      %v594 = vxor.u32 %v580, 2147483648
      %v595 = vxor.u32 %v583, 2147483648
      %v596 = vxor.u32 %v588, 2147483648
      %v597 = vxor.u32 %v591, 2147483648
      %v598 = vmul.f32 %v594, 1.442695
      %v599 = vpow.pop %v598
      %v600 = vmul.f32 %v595, 1.442695
      %v601 = vpow.pop %v600
      %v602 = vmul.f32 %v596, 1.442695
      %v603 = vpow.pop %v602
      %v604 = vmul.f32 %v597, 1.442695
      %v605 = vpow.pop %v604
      %v606 = vadd.f32 %v599, 1.0
      %v607 = vadd.f32 %v601, 1.0
      %v608 = vadd.f32 %v603, 1.0
      %v609 = vadd.f32 %v605, 1.0
      %v610 = vrcp.pop %v606
      %v611 = vmul.f32 1.0, %v610
      %v612 = vrcp.pop %v607
      %v613 = vmul.f32 1.0, %v612
      %v614 = vrcp.pop %v608
      %v615 = vmul.f32 1.0, %v614
      %v616 = vrcp.pop %v609
      %v617 = vmul.f32 1.0, %v616
      %v618 = vmul.f32 %v564, %v611
      %v619 = vmul.f32 %v567, %v613
      %v620 = vmul.f32 %v572, %v615
      %v621 = vmul.f32 %v575, %v617
      %v622 = vpack.c.bf16 %v619, %v618
      %v623 = vpack.c.bf16 %v621, %v620
      %v624 = vld [vmem:[%s5] sm:$0xf]
      %v625 = vld [vmem:[%s5 + $0x4] sm:$0xf]
      %v626 = vld [vmem:[%s5 + $0x8] sm:$0xf]
      %v627 = vld [vmem:[%s5 + $0xc] sm:$0xf]
      %v628 = vld [vmem:[%s5 + $0x10] sm:$0xf]
      %v629 = vld [vmem:[%s5 + $0x14] sm:$0xf]
      %v630 = vld [vmem:[%s5 + $0x18] sm:$0xf]
      %v631 = vld [vmem:[%s5 + $0x1c] sm:$0xf]
      %v632 = vld [vmem:[%s5 + $0x20] sm:$0xf]
      %v633 = vld [vmem:[%s5 + $0x24] sm:$0xf]
      %v634 = vld [vmem:[%s5 + $0x28] sm:$0xf]
      %v635 = vld [vmem:[%s5 + $0x2c] sm:$0xf]
      %v636 = vld [vmem:[%s6] sm:$0xff]
      %v637 = vld [vmem:[%s6 + $0x8] sm:$0xff]
      %v638 = vld [vmem:[%s6 + $0x10] sm:$0xff]
      %v639 = vld [vmem:[%s6 + $0x18] sm:$0xff]
      %v640 = vld [vmem:[%s6 + $0x20] sm:$0xff]
      %v641 = vld [vmem:[%s6 + $0x28] sm:$0xff]
      %v642 = vld [vmem:[%s6 + $0x30] sm:$0xff]
      %v643 = vld [vmem:[%s6 + $0x38] sm:$0xff]
      %v644 = vld [vmem:[%s6 + $0x40] sm:$0xff]
      %v645 = vld [vmem:[%s6 + $0x48] sm:$0xff]
      %v646 = vld [vmem:[%s6 + $0x50] sm:$0xff]
      %v647 = vld [vmem:[%s6 + $0x58] sm:$0xff]
      %649 = vset.pattern.permute.xlu0 0
      %650 = vperm.xlu0 %649, %v636
      %v651 = vpop.permute.xlu0 %650
      %654 = vset.pattern.permute.xlu0 0
      %655 = vperm.xlu0 %654, %v637
      %v656 = vpop.permute.xlu0 %655
      %659 = vset.pattern.permute.xlu0 0
      %660 = vperm.xlu0 %659, %v638
      %v661 = vpop.permute.xlu0 %660
      %664 = vset.pattern.permute.xlu0 0
      %665 = vperm.xlu0 %664, %v639
      %v666 = vpop.permute.xlu0 %665
      %669 = vset.pattern.permute.xlu0 0
      %670 = vperm.xlu0 %669, %v640
      %v671 = vpop.permute.xlu0 %670
      %674 = vset.pattern.permute.xlu0 0
      %675 = vperm.xlu0 %674, %v641
      %v676 = vpop.permute.xlu0 %675
      %679 = vset.pattern.permute.xlu0 0
      %680 = vperm.xlu0 %679, %v642
      %v681 = vpop.permute.xlu0 %680
      %684 = vset.pattern.permute.xlu0 0
      %685 = vperm.xlu0 %684, %v643
      %v686 = vpop.permute.xlu0 %685
      %689 = vset.pattern.permute.xlu0 0
      %690 = vperm.xlu0 %689, %v644
      %v691 = vpop.permute.xlu0 %690
      %694 = vset.pattern.permute.xlu0 0
      %695 = vperm.xlu0 %694, %v645
      %v696 = vpop.permute.xlu0 %695
      %699 = vset.pattern.permute.xlu0 0
      %700 = vperm.xlu0 %699, %v646
      %v701 = vpop.permute.xlu0 %700
      %704 = vset.pattern.permute.xlu0 0
      %705 = vperm.xlu0 %704, %v647
      %v706 = vpop.permute.xlu0 %705
      %v720 = vunpack.c.l.b16 %v624
      %v721 = vunpack.c.l.b16 %v625
      %v722 = vunpack.c.l.b16 %v626
      %v723 = vunpack.c.l.b16 %v627
      %v724 = vunpack.c.l.b16 %v628
      %v725 = vunpack.c.l.b16 %v629
      %v726 = vunpack.c.l.b16 %v630
      %v727 = vunpack.c.l.b16 %v631
      %v728 = vunpack.c.l.b16 %v632
      %v729 = vunpack.c.l.b16 %v633
      %v730 = vunpack.c.l.b16 %v634
      %v731 = vunpack.c.l.b16 %v635
      %v732 = vpack.c.b16 %v721, %v720
      %v733 = vpack.c.b16 %v723, %v722
      %v734 = vpack.c.b16 %v725, %v724
      %v735 = vpack.c.b16 %v727, %v726
      %v736 = vpack.c.b16 %v729, %v728
      %v737 = vpack.c.b16 %v731, %v730
      %v739 = vsel %vm516, %v732, 0
      %v742 = vsel %vm516, %v733, 0
      %v745 = vsel %vm516, %v734, 0
      %v748 = vsel %vm516, %v735, 0
      %v751 = vsel %vm516, %v736, 0
      %v754 = vsel %vm516, %v737, 0
      %756 = vmatprep.subr.bf16.mxu0 0
      %757 = vmatpush1.bf16.msra.mxu0 %v622
      %758 = vmatprep.subr.bf16.mxu0 0
      %759 = vmatpush1.bf16.msra.mxu0 %v623
      %760 = vmatprep.subr.bf16.mxu0 0
      %761 = vmatpush1.bf16.msra.mxu0 0
      %762 = vmatprep.subr.bf16.mxu0 0
      %763 = vmatpush1.bf16.msra.mxu0 0
      %764 = vmatprep.subr.bf16.mxu0 0
      %765 = vmatpush1.bf16.msra.mxu0 0
      %766 = vmatprep.subr.bf16.mxu0 0
      %767 = vmatpush1.bf16.msra.mxu0 0
      %768 = vmatprep.subr.bf16.mxu0 0
      %769 = vmatpush1.bf16.msra.mxu0 0
      %770 = vmatprep.subr.bf16.mxu0 0
      %771 = vmatpush1.bf16.msra.mxu0 0
      %772 = vmatprep.subr.bf16.mxu0 0
      %773 = vmatpush1.bf16.msra.mxu0 0
      %774 = vmatprep.subr.bf16.mxu0 0
      %775 = vmatpush1.bf16.msra.mxu0 0
      %776 = vmatprep.subr.bf16.mxu0 0
      %777 = vmatpush1.bf16.msra.mxu0 0
      %778 = vmatprep.subr.bf16.mxu0 0
      %779 = vmatpush1.bf16.msra.mxu0 0
      %780 = vmatprep.subr.bf16.mxu0 0
      %781 = vmatpush1.bf16.msra.mxu0 0
      %782 = vmatprep.subr.bf16.mxu0 0
      %783 = vmatpush1.bf16.msra.mxu0 0
      %784 = vmatprep.subr.bf16.mxu0 0
      %785 = vmatpush1.bf16.msra.mxu0 0
      %786 = vmatprep.subr.bf16.mxu0 0
      %787 = vmatpush1.bf16.msra.mxu0 0
      %788 = vmatprep.mubr.bf16.mxu0 0
      %789 = vmatmul.mubr.bf16.gmra.mrb[0].mxu0 %v739
      %v790 = vpop.f32.mrb[0].mxu0
      %v791 = vadd.f32 %v651, %v790
      %v792 = vpop.f32.mrb[0].mxu0
      %v793 = vpop.f32.mrb[0].mxu0
      %v794 = vadd.f32 %v656, %v793
      %v795 = vpop.f32.mrb[0].mxu0
      %796 = vmatprep.mubr.bf16.mxu0 0
      %797 = vmatmul.mubr.bf16.gmra.mrb[0].mxu0 %v742
      %v798 = vpop.f32.mrb[0].mxu0
      %v799 = vadd.f32 %v661, %v798
      %v800 = vpop.f32.mrb[0].mxu0
      %v801 = vpop.f32.mrb[0].mxu0
      %v802 = vadd.f32 %v666, %v801
      %v803 = vpop.f32.mrb[0].mxu0
      %804 = vmatprep.mubr.bf16.mxu0 0
      %805 = vmatmul.mubr.bf16.gmra.mrb[0].mxu0 %v745
      %v806 = vpop.f32.mrb[0].mxu0
      %v807 = vadd.f32 %v671, %v806
      %v808 = vpop.f32.mrb[0].mxu0
      %v809 = vpop.f32.mrb[0].mxu0
      %v810 = vadd.f32 %v676, %v809
      %v811 = vpop.f32.mrb[0].mxu0
      %812 = vmatprep.mubr.bf16.mxu0 0
      %813 = vmatmul.mubr.bf16.gmra.mrb[0].mxu0 %v748
      %v814 = vpop.f32.mrb[0].mxu0
      %v815 = vadd.f32 %v681, %v814
      %v816 = vpop.f32.mrb[0].mxu0
      %v817 = vpop.f32.mrb[0].mxu0
      %v818 = vadd.f32 %v686, %v817
      %v819 = vpop.f32.mrb[0].mxu0
      %820 = vmatprep.mubr.bf16.mxu0 0
      %821 = vmatmul.mubr.bf16.gmra.mrb[0].mxu0 %v751
      %v822 = vpop.f32.mrb[0].mxu0
      %v823 = vadd.f32 %v691, %v822
      %v824 = vpop.f32.mrb[0].mxu0
      %v825 = vpop.f32.mrb[0].mxu0
      %v826 = vadd.f32 %v696, %v825
      %v827 = vpop.f32.mrb[0].mxu0
      %828 = vmatprep.mubr.bf16.mxu0 0
      %829 = vmatmul.mubr.bf16.gmra.mrb[0].mxu0 %v754
      %v830 = vpop.f32.mrb[0].mxu0
      %v831 = vadd.f32 %v701, %v830
      %v832 = vpop.f32.mrb[0].mxu0
      %v833 = vpop.f32.mrb[0].mxu0
      %v834 = vadd.f32 %v706, %v833
      %v835 = vpop.f32.mrb[0].mxu0
      %836 = vdwg.mxu0
      %v837 = vmax.f32 %v791, %v807
      %v838 = vmax.f32 %v794, %v810
      %v839 = vmax.f32 %v799, %v815
      %v840 = vmax.f32 %v802, %v818
      %v841 = vmax.f32 %v837, %v823
      %v842 = vmax.f32 %v838, %v826
      %v843 = vmax.f32 %v839, %v831
      %v844 = vmax.f32 %v840, %v834
      %v845 = vsub.f32 %v791, %v841
      %v846 = vsub.f32 %v794, %v842
      %v847 = vsub.f32 %v799, %v843
      %v848 = vsub.f32 %v802, %v844
      %v849 = vmul.f32 %v845, 1.442695
      %v850 = vpow.pop %v849
      %v851 = vmul.f32 %v846, 1.442695
      %v852 = vpow.pop %v851
      %v853 = vmul.f32 %v847, 1.442695
      %v854 = vpow.pop %v853
      %v855 = vmul.f32 %v848, 1.442695
      %v856 = vpow.pop %v855
      %v857 = vsub.f32 %v807, %v841
      %v858 = vsub.f32 %v810, %v842
      %v859 = vsub.f32 %v815, %v843
      %v860 = vsub.f32 %v818, %v844
      %v861 = vmul.f32 %v857, 1.442695
      %v862 = vpow.pop %v861
      %v863 = vmul.f32 %v858, 1.442695
      %v864 = vpow.pop %v863
      %v865 = vmul.f32 %v859, 1.442695
      %v866 = vpow.pop %v865
      %v867 = vmul.f32 %v860, 1.442695
      %v868 = vpow.pop %v867
      %v869 = vsub.f32 %v823, %v841
      %v870 = vsub.f32 %v826, %v842
      %v871 = vsub.f32 %v831, %v843
      %v872 = vsub.f32 %v834, %v844
      %v873 = vmul.f32 %v869, 1.442695
      %v874 = vpow.pop %v873
      %v875 = vmul.f32 %v870, 1.442695
      %v876 = vpow.pop %v875
      %v877 = vmul.f32 %v871, 1.442695
      %v878 = vpow.pop %v877
      %v879 = vmul.f32 %v872, 1.442695
      %v880 = vpow.pop %v879
      %v881 = vadd.f32 %v850, %v862
      %v882 = vadd.f32 %v852, %v864
      %v883 = vadd.f32 %v854, %v866
      %v884 = vadd.f32 %v856, %v868
      %v885 = vadd.f32 %v881, %v874
      %v886 = vadd.f32 %v882, %v876
      %v887 = vadd.f32 %v883, %v878
      %v888 = vadd.f32 %v884, %v880
      %v889 = vld [vmem:[%s7] sm:$0xf]
      %v890 = vld [vmem:[%s7 + $0x4] sm:$0xf]
      %v891 = vld [vmem:[%s7 + $0x8] sm:$0xf]
      %v892 = vld [vmem:[%s7 + $0xc] sm:$0xf]
      %v893 = vld [vmem:[%s7 + $0x10] sm:$0xf]
      %v894 = vld [vmem:[%s7 + $0x14] sm:$0xf]
      %v897 = vunpack.c.l.b16 %v889
      %v898 = vunpack.c.l.b16 %v890
      %v899 = vpack.c.b16 %v898, %v897
      %v902 = vsel %vm338, %v622, 0
      %v905 = vsel %vm338, %v623, 0
      %907 = vmatprep.subr.bf16.mxu0 0
      %908 = vmatpush1.bf16.msra.mxu0 %v899
      %909 = vmatprep.subr.bf16.mxu0 0
      %910 = vmatpush1.bf16.msra.mxu0 0
      %911 = vmatprep.subr.bf16.mxu0 0
      %912 = vmatpush1.bf16.msra.mxu0 0
      %913 = vmatprep.subr.bf16.mxu0 0
      %914 = vmatpush1.bf16.msra.mxu0 0
      %915 = vmatprep.subr.bf16.mxu0 0
      %916 = vmatpush1.bf16.msra.mxu0 0
      %917 = vmatprep.subr.bf16.mxu0 0
      %918 = vmatpush1.bf16.msra.mxu0 0
      %919 = vmatprep.subr.bf16.mxu0 0
      %920 = vmatpush1.bf16.msra.mxu0 0
      %921 = vmatprep.subr.bf16.mxu0 0
      %922 = vmatpush1.bf16.msra.mxu0 0
      %923 = vmatprep.subr.bf16.mxu0 0
      %924 = vmatpush1.bf16.msra.mxu0 0
      %925 = vmatprep.subr.bf16.mxu0 0
      %926 = vmatpush1.bf16.msra.mxu0 0
      %927 = vmatprep.subr.bf16.mxu0 0
      %928 = vmatpush1.bf16.msra.mxu0 0
      %929 = vmatprep.subr.bf16.mxu0 0
      %930 = vmatpush1.bf16.msra.mxu0 0
      %931 = vmatprep.subr.bf16.mxu0 0
      %932 = vmatpush1.bf16.msra.mxu0 0
      %933 = vmatprep.subr.bf16.mxu0 0
      %934 = vmatpush1.bf16.msra.mxu0 0
      %935 = vmatprep.subr.bf16.mxu0 0
      %936 = vmatpush1.bf16.msra.mxu0 0
      %937 = vmatprep.subr.bf16.mxu0 0
      %938 = vmatpush1.bf16.msra.mxu0 0
      %939 = vmatprep.mubr.bf16.mxu0 0
      %940 = vmatmul.mubr.bf16.gmra.mrb[0].mxu0 %v902
      %v941 = vpop.f32.mrb[0].mxu0
      %v942 = vadd.f32 0.0, %v941
      %v943 = vpop.f32.mrb[0].mxu0
      %v944 = vpop.f32.mrb[0].mxu0
      %v945 = vadd.f32 0.0, %v944
      %v946 = vpop.f32.mrb[0].mxu0
      %947 = vmatprep.mubr.bf16.mxu0 0
      %948 = vmatmul.mubr.bf16.gmra.mrb[0].mxu0 %v905
      %v949 = vpop.f32.mrb[0].mxu0
      %v950 = vadd.f32 0.0, %v949
      %v951 = vpop.f32.mrb[0].mxu0
      %v952 = vpop.f32.mrb[0].mxu0
      %v953 = vadd.f32 0.0, %v952
      %v954 = vpop.f32.mrb[0].mxu0
      %955 = vdwg.mxu0
      %v956 = vmul.f32 %v850, %v942
      %v957 = vmul.f32 %v852, %v945
      %v958 = vmul.f32 %v854, %v950
      %v959 = vmul.f32 %v856, %v953
      %v960 = vadd.f32 %v956, 0.0
      %v961 = vadd.f32 %v957, 0.0
      %v962 = vadd.f32 %v958, 0.0
      %v963 = vadd.f32 %v959, 0.0
      %v966 = vunpack.c.l.b16 %v891
      %v967 = vunpack.c.l.b16 %v892
      %v968 = vpack.c.b16 %v967, %v966
      %970 = vmatprep.subr.bf16.mxu0 0
      %971 = vmatpush1.bf16.msra.mxu0 %v968
      %972 = vmatprep.subr.bf16.mxu0 0
      %973 = vmatpush1.bf16.msra.mxu0 0
      %974 = vmatprep.subr.bf16.mxu0 0
      %975 = vmatpush1.bf16.msra.mxu0 0
      %976 = vmatprep.subr.bf16.mxu0 0
      %977 = vmatpush1.bf16.msra.mxu0 0
      %978 = vmatprep.subr.bf16.mxu0 0
      %979 = vmatpush1.bf16.msra.mxu0 0
      %980 = vmatprep.subr.bf16.mxu0 0
      %981 = vmatpush1.bf16.msra.mxu0 0
      %982 = vmatprep.subr.bf16.mxu0 0
      %983 = vmatpush1.bf16.msra.mxu0 0
      %984 = vmatprep.subr.bf16.mxu0 0
      %985 = vmatpush1.bf16.msra.mxu0 0
      %986 = vmatprep.subr.bf16.mxu0 0
      %987 = vmatpush1.bf16.msra.mxu0 0
      %988 = vmatprep.subr.bf16.mxu0 0
      %989 = vmatpush1.bf16.msra.mxu0 0
      %990 = vmatprep.subr.bf16.mxu0 0
      %991 = vmatpush1.bf16.msra.mxu0 0
      %992 = vmatprep.subr.bf16.mxu0 0
      %993 = vmatpush1.bf16.msra.mxu0 0
      %994 = vmatprep.subr.bf16.mxu0 0
      %995 = vmatpush1.bf16.msra.mxu0 0
      %996 = vmatprep.subr.bf16.mxu0 0
      %997 = vmatpush1.bf16.msra.mxu0 0
      %998 = vmatprep.subr.bf16.mxu0 0
      %999 = vmatpush1.bf16.msra.mxu0 0
      %1000 = vmatprep.subr.bf16.mxu0 0
      %1001 = vmatpush1.bf16.msra.mxu0 0
      %1002 = vmatprep.mubr.bf16.mxu0 0
      %1003 = vmatmul.mubr.bf16.gmra.mrb[0].mxu0 %v902
      %v1004 = vpop.f32.mrb[0].mxu0
      %v1005 = vadd.f32 0.0, %v1004
      %v1006 = vpop.f32.mrb[0].mxu0
      %v1007 = vpop.f32.mrb[0].mxu0
      %v1008 = vadd.f32 0.0, %v1007
      %v1009 = vpop.f32.mrb[0].mxu0
      %1010 = vmatprep.mubr.bf16.mxu0 0
      %1011 = vmatmul.mubr.bf16.gmra.mrb[0].mxu0 %v905
      %v1012 = vpop.f32.mrb[0].mxu0
      %v1013 = vadd.f32 0.0, %v1012
      %v1014 = vpop.f32.mrb[0].mxu0
      %v1015 = vpop.f32.mrb[0].mxu0
      %v1016 = vadd.f32 0.0, %v1015
      %v1017 = vpop.f32.mrb[0].mxu0
      %1018 = vdwg.mxu0
      %v1019 = vmul.f32 %v862, %v1005
      %v1020 = vmul.f32 %v864, %v1008
      %v1021 = vmul.f32 %v866, %v1013
      %v1022 = vmul.f32 %v868, %v1016
      %v1023 = vadd.f32 %v960, %v1019
      %v1024 = vadd.f32 %v961, %v1020
      %v1025 = vadd.f32 %v962, %v1021
      %v1026 = vadd.f32 %v963, %v1022
      %v1029 = vunpack.c.l.b16 %v893
      %v1030 = vunpack.c.l.b16 %v894
      %v1031 = vpack.c.b16 %v1030, %v1029
      %1033 = vmatprep.subr.bf16.mxu0 0
      %1034 = vmatpush1.bf16.msra.mxu0 %v1031
      %1035 = vmatprep.subr.bf16.mxu0 0
      %1036 = vmatpush1.bf16.msra.mxu0 0
      %1037 = vmatprep.subr.bf16.mxu0 0
      %1038 = vmatpush1.bf16.msra.mxu0 0
      %1039 = vmatprep.subr.bf16.mxu0 0
      %1040 = vmatpush1.bf16.msra.mxu0 0
      %1041 = vmatprep.subr.bf16.mxu0 0
      %1042 = vmatpush1.bf16.msra.mxu0 0
      %1043 = vmatprep.subr.bf16.mxu0 0
      %1044 = vmatpush1.bf16.msra.mxu0 0
      %1045 = vmatprep.subr.bf16.mxu0 0
      %1046 = vmatpush1.bf16.msra.mxu0 0
      %1047 = vmatprep.subr.bf16.mxu0 0
      %1048 = vmatpush1.bf16.msra.mxu0 0
      %1049 = vmatprep.subr.bf16.mxu0 0
      %1050 = vmatpush1.bf16.msra.mxu0 0
      %1051 = vmatprep.subr.bf16.mxu0 0
      %1052 = vmatpush1.bf16.msra.mxu0 0
      %1053 = vmatprep.subr.bf16.mxu0 0
      %1054 = vmatpush1.bf16.msra.mxu0 0
      %1055 = vmatprep.subr.bf16.mxu0 0
      %1056 = vmatpush1.bf16.msra.mxu0 0
      %1057 = vmatprep.subr.bf16.mxu0 0
      %1058 = vmatpush1.bf16.msra.mxu0 0
      %1059 = vmatprep.subr.bf16.mxu0 0
      %1060 = vmatpush1.bf16.msra.mxu0 0
      %1061 = vmatprep.subr.bf16.mxu0 0
      %1062 = vmatpush1.bf16.msra.mxu0 0
      %1063 = vmatprep.subr.bf16.mxu0 0
      %1064 = vmatpush1.bf16.msra.mxu0 0
      %1065 = vmatprep.mubr.bf16.mxu0 0
      %1066 = vmatmul.mubr.bf16.gmra.mrb[0].mxu0 %v902
      %v1067 = vpop.f32.mrb[0].mxu0
      %v1068 = vadd.f32 0.0, %v1067
      %v1069 = vpop.f32.mrb[0].mxu0
      %v1070 = vpop.f32.mrb[0].mxu0
      %v1071 = vadd.f32 0.0, %v1070
      %v1072 = vpop.f32.mrb[0].mxu0
      %1073 = vmatprep.mubr.bf16.mxu0 0
      %1074 = vmatmul.mubr.bf16.gmra.mrb[0].mxu0 %v905
      %v1075 = vpop.f32.mrb[0].mxu0
      %v1076 = vadd.f32 0.0, %v1075
      %v1077 = vpop.f32.mrb[0].mxu0
      %v1078 = vpop.f32.mrb[0].mxu0
      %v1079 = vadd.f32 0.0, %v1078
      %v1080 = vpop.f32.mrb[0].mxu0
      %1081 = vdwg.mxu0
      %v1082 = vmul.f32 %v874, %v1068
      %v1083 = vmul.f32 %v876, %v1071
      %v1084 = vmul.f32 %v878, %v1076
      %v1085 = vmul.f32 %v880, %v1079
      %v1086 = vadd.f32 %v1023, %v1082
      %v1087 = vadd.f32 %v1024, %v1083
      %v1088 = vadd.f32 %v1025, %v1084
      %v1089 = vadd.f32 %v1026, %v1085
      %v1090 = vrcp.pop %v885
      %v1091 = vmul.f32 %v1086, %v1090
      %v1092 = vrcp.pop %v886
      %v1093 = vmul.f32 %v1087, %v1092
      %v1094 = vrcp.pop %v887
      %v1095 = vmul.f32 %v1088, %v1094
      %v1096 = vrcp.pop %v888
      %v1097 = vmul.f32 %v1089, %v1096
      %v1098 = vld [vmem:[%s8] sm:$0xff]
      %v1099 = vld [vmem:[%s8 + $0x8] sm:$0xff]
      %v1100 = vld [vmem:[%s8 + $0x10] sm:$0xff]
      %v1101 = vld [vmem:[%s8 + $0x18] sm:$0xff]
      %1103 = vset.pattern.permute.xlu0 0
      %1104 = vperm.xlu0 %1103, %v1098
      %v1105 = vpop.permute.xlu0 %1104
      %1108 = vset.pattern.permute.xlu0 0
      %1109 = vperm.xlu0 %1108, %v1099
      %v1110 = vpop.permute.xlu0 %1109
      %1113 = vset.pattern.permute.xlu0 0
      %1114 = vperm.xlu0 %1113, %v1100
      %v1115 = vpop.permute.xlu0 %1114
      %1118 = vset.pattern.permute.xlu0 0
      %1119 = vperm.xlu0 %1118, %v1101
      %v1120 = vpop.permute.xlu0 %1119
      %v1122 = vadd.f32 %v1091, %v1105
      %v1123 = vadd.f32 %v1093, %v1110
      %v1124 = vadd.f32 %v1095, %v1115
      %v1125 = vadd.f32 %v1097, %v1120
      %v1126 = vadd.f32 %v1122, %v334
      %v1127 = vadd.f32 %v1123, %v335
      %v1128 = vadd.f32 %v1124, %v336
      %v1129 = vadd.f32 %v1125, %v337
      %1130 = vst.msk [vmem:[%s332] sm:$0xff] %vm338, %v1126
      %1131 = vst.msk [vmem:[%s332 + $0x8] sm:$0xff] %vm338, %v1127
      %1132 = vst.msk [vmem:[%s332 + $0x10] sm:$0xff] %vm338, %v1128
      %1133 = vst.msk [vmem:[%s332 + $0x18] sm:$0xff] %vm338, %v1129
      %p1134 = scmp.lt.s32.totalorder %s20, 1
      %s1135 = scalar_select %p1134, %s20, 1
      %s1136 = smul.addr %s1135, 4
      %s1137 = smul.addr %s1136, 8
      %s1138 = scalar_lea.vmem %s9, %s1137
      // Predicated region
      $region57: #{tpu_custom_call.1} parent=55 // pred_check
        %p1139 = pneg %p232
      $region58: #{tpu_custom_call.1} parent=55 // pred_check_branch
        %1141 = sbr.rel (%p1139) target = $region60
      $region59: #{tpu_custom_call.1} parent=55 // pred_region
        _
      $region60: #{tpu_custom_call.1} parent=55 // pred_fallthru
        _
    $region56: #{tpu_custom_call.1} parent=5 // pred_fallthru
      _
    %p1142 = scmp.le.s32.totalorder 2, %s15
    // Predicated region
    $region61: #{tpu_custom_call.1} parent=5 // pred_check
      %p1143 = pneg %p1142
    $region62: #{tpu_custom_call.1} parent=5 // pred_check_branch
      %1145 = sbr.rel (%p1143) target = $region64
    $region63: #{tpu_custom_call.1} parent=5 // pred_region
      %s1146 = ssub.s32 %s15, 2
      // Predicated region
      $region65: #{tpu_custom_call.1} parent=63 // pred_check
        %p1147 = pneg %p238
      $region66: #{tpu_custom_call.1} parent=63 // pred_check_branch
        %1149 = sbr.rel (%p1147) target = $region68
      $region67: #{tpu_custom_call.1} parent=63 // pred_region
        %p1150 = scmp.lt.s32.totalorder %s21, 1
        %s1151 = scalar_select %p1150, %s21, 1
        %s1152 = smul.addr %s1151, 4
        %s1153 = smul.addr %s1152, 8
        %s1154 = scalar_lea.vmem %s9, %s1153
      $region68: #{tpu_custom_call.1} parent=63 // pred_fallthru
        _
    $region64: #{tpu_custom_call.1} parent=5 // pred_fallthru
      _
  $region6: #{tpu_custom_call.1} parent=0 // loop_footer
    %s19 = sadd.s32 1, %s15
  $region7: #{tpu_custom_call.1} parent=0 // loop_footer_branch
    %14 = sbr.rel target = $region3
  $region8: #{tpu_custom_call.1} parent=0 // loop_exit
    _

</llo_original>
